<compile_context>
chip_gen: v7x
topology: tpu7x:2x2x1
jax: 0.10.0
libtpu: 0.0.40
codegen_flags: <defaults>
</compile_context>

<pallas_src>
import jax
import jax.numpy as jnp
from jax.experimental import pallas as pl
from jax.experimental.pallas import tpu as pltpu

SIGMA_DATA = 0.5
HIDDEN = 32


def _cdiv(a, b):
    return -(-a // b)


def _edm_precond_kernel(sigma_ref, x_ref, w1_ref, b1_ref, wemb_ref, bemb_ref,
                        w2_ref, b2_ref, out_ref):
    i = pl.program_id(0)
    bt = x_ref.shape[0]                       # images per batch-tile (static)
    sd2 = SIGMA_DATA * SIGMA_DATA

    # Load the (tiny) weights once per grid step; reused for the whole tile.
    w1 = w1_ref[...]                          # (HIDDEN, C)
    b1 = b1_ref[...]                          # (HIDDEN, 1)
    wemb = wemb_ref[...]                      # (HIDDEN, 1)
    bemb = bemb_ref[...]                      # (HIDDEN, 1)
    w2 = w2_ref[...]                          # (C, HIDDEN)
    b2 = b2_ref[...]                          # (C, 1)

    @pl.loop(0, bt)
    def _(j):
        sigma = sigma_ref[i * bt + j]         # scalar f32 from SMEM

        s2 = sigma * sigma
        c_skip = sd2 / (s2 + sd2)
        c_out = sigma * SIGMA_DATA * jax.lax.rsqrt(s2 + sd2)
        c_in = jax.lax.rsqrt(sd2 + s2)
        c_noise = jnp.log(sigma) * 0.25

        x = x_ref[j]                          # (C, HW) f32
        x_in = c_in * x                       # preconditioned model input

        # --- synthetic inner model F(x_in, c_noise) ---
        emb = jax.nn.silu(wemb * c_noise + bemb)                          # (HIDDEN, 1)
        h = jnp.dot(w1, x_in, preferred_element_type=jnp.float32)         # (HIDDEN, HW)
        h = jax.nn.silu(h + b1 + emb)
        f_x = jnp.dot(w2, h, preferred_element_type=jnp.float32) + b2     # (C, HW)

        # --- EDM combine ---
        out_ref[j] = c_skip * x + c_out * f_x


def init_params(key, img_channels, hidden=HIDDEN):
    k1, k2, k3 = jax.random.split(key, 3)
    w1 = 0.2 * jax.random.normal(k1, (hidden, img_channels), jnp.float32)
    b1 = jnp.zeros((hidden, 1), jnp.float32)
    wemb = 0.2 * jax.random.normal(k2, (hidden, 1), jnp.float32)
    bemb = jnp.zeros((hidden, 1), jnp.float32)
    w2 = 0.2 * jax.random.normal(k3, (img_channels, hidden), jnp.float32)
    b2 = jnp.zeros((img_channels, 1), jnp.float32)
    return (w1, b1, wemb, bemb, w2, b2)


def _pick_block_b(B, C, HW, tile_budget_bytes, min_steps=2):
    """Biggest batch-tile that fits the VMEM budget, keeping >=2 grid steps
    (v7x dual-TensorCore) when the batch allows it."""
    bt = max(1, tile_budget_bytes // (C * HW * 4))
    if B >= min_steps:
        bt = min(bt, _cdiv(B, min_steps))
    return max(1, min(bt, B))


def edm_precond_forward(x, sigma, params, *, tile_budget_bytes=2 * 1024 * 1024):
    """EDMPrecond.forward: x (B,C,H,W), sigma (B,) -> D_x (B,C,H,W) float32."""
    B, C, H, W = x.shape
    HW = H * W
    HWp = _cdiv(HW, 128) * 128               # lane-dense last dim

    x2 = x.astype(jnp.float32).reshape(B, C, HW)
    if HWp != HW:
        x2 = jnp.pad(x2, ((0, 0), (0, 0), (0, HWp - HW)))

    bt = _pick_block_b(B, C, HWp, tile_budget_bytes)
    nb = _cdiv(B, bt)
    Bp = nb * bt

    sigma1 = sigma.astype(jnp.float32).reshape(B)
    if Bp != B:
        x2 = jnp.pad(x2, ((0, Bp - B), (0, 0), (0, 0)))
        sigma1 = jnp.pad(sigma1, (0, Bp - B), constant_values=1.0)  # avoid log(0)

    w1, b1, wemb, bemb, w2, b2 = params

    def full_spec(shape):
        return pl.BlockSpec(shape, lambda i: tuple(0 for _ in shape))

    out = pl.pallas_call(
        _edm_precond_kernel,
        out_shape=jax.ShapeDtypeStruct((Bp, C, HWp), jnp.float32),
        grid=(nb,),
        in_specs=[
            pl.BlockSpec(memory_space=pltpu.MemorySpace.SMEM),   # sigma (Bp,)
            pl.BlockSpec((bt, C, HWp), lambda i: (i, 0, 0)),     # x batch-tile
            full_spec(w1.shape),
            full_spec(b1.shape),
            full_spec(wemb.shape),
            full_spec(bemb.shape),
            full_spec(w2.shape),
            full_spec(b2.shape),
        ],
        out_specs=pl.BlockSpec((bt, C, HWp), lambda i: (i, 0, 0)),
        compiler_params=pltpu.CompilerParams(
            dimension_semantics=("parallel",),
            vmem_limit_bytes=32 * 1024 * 1024),
    )(sigma1, x2, w1, b1, wemb, bemb, w2, b2)

    out = out[:B, :, :HW].reshape(B, C, H, W)
    return out


def edm_precond_reference(x, sigma, params):
    """Pure-JAX reference of the same forward (for correctness check)."""
    B, C, H, W = x.shape
    x = x.astype(jnp.float32)
    sigma = sigma.astype(jnp.float32).reshape(-1, 1, 1, 1)
    w1, b1, wemb, bemb, w2, b2 = params
    c_skip = SIGMA_DATA ** 2 / (sigma ** 2 + SIGMA_DATA ** 2)
    c_out = sigma * SIGMA_DATA / jnp.sqrt(sigma ** 2 + SIGMA_DATA ** 2)
    c_in = 1.0 / jnp.sqrt(SIGMA_DATA ** 2 + sigma ** 2)
    c_noise = jnp.log(sigma) / 4.0                       # (B,1,1,1)

    x_in = (c_in * x).reshape(B, C, H * W)               # (B,C,HW)
    emb = jax.nn.silu(wemb[None] * c_noise.reshape(B, 1, 1) + bemb[None])  # (B,HIDDEN,1)
    h = jax.nn.silu(jnp.einsum('hc,bcs->bhs', w1, x_in) + b1[None] + emb)
    f_x = jnp.einsum('ch,bhs->bcs', w2, h) + b2[None]
    f_x = f_x.reshape(B, C, H, W)
    return c_skip * x + c_out * f_x


if __name__ == "__main__":
    key = jax.random.PRNGKey(0)
    kp, kdata = jax.random.split(key)
    params = init_params(kp, 4)

    # Primary small case + a couple of cases exercising batch-tiling (>1 image
    # per grid step), batch padding, and non-128-multiple spatial padding.
    cases = [(2, 4, 16, 16), (5, 4, 16, 16), (3, 4, 12, 12)]
    for case_idx, (B, C, H, W) in enumerate(cases):
        kc = jax.random.fold_in(kdata, case_idx)
        kx, ks = jax.random.split(kc)
        x = jax.random.normal(kx, (B, C, H, W), jnp.float32)
        sigma = jnp.exp(0.5 * jax.random.normal(ks, (B,), jnp.float32)) + 0.1

        d_x = jax.block_until_ready(edm_precond_forward(x, sigma, params))
        d_ref = edm_precond_reference(x, sigma, params)

        assert d_x.shape == (B, C, H, W) and d_x.dtype == jnp.float32
        assert jnp.allclose(d_x, d_ref, rtol=2e-3, atol=2e-3), \
            f"mismatch vs reference at shape {(B, C, H, W)}"

    print("KERNEL_OK")
</pallas_src>

<mosaic_0001>
module attributes {stable_mosaic.version = 11 : i64} {
  func.func @_edm_precond_kernel(%arg0: i32, %arg1: memref<2xf32, #tpu.memory_space<smem>>, %arg2: memref<1x4x256xf32, #tpu.memory_space<vmem>>, %arg3: memref<32x4xf32, #tpu.memory_space<vmem>>, %arg4: memref<32x1xf32, #tpu.memory_space<vmem>>, %arg5: memref<32x1xf32, #tpu.memory_space<vmem>>, %arg6: memref<32x1xf32, #tpu.memory_space<vmem>>, %arg7: memref<4x32xf32, #tpu.memory_space<vmem>>, %arg8: memref<4x1xf32, #tpu.memory_space<vmem>>, %arg9: memref<1x4x256xf32, #tpu.memory_space<vmem>>) attributes {dimension_semantics = [#tpu.dimension_semantics<parallel>], iteration_bounds = array<i64: 2>, scalar_prefetch = 0 : i64, scratch_operands = 0 : i64, tpu.core_type = #tpu.core_type<tc>, window_params = [{transform_indices = @transform_0, window_bounds = array<i64: 2>}, {transform_indices = @transform_1, window_bounds = array<i64: 1, 4, 256>}, {pipeline_mode = #tpu.pipeline_mode<synchronous>, transform_indices = @transform_2, window_bounds = array<i64: 32, 4>}, {pipeline_mode = #tpu.pipeline_mode<synchronous>, transform_indices = @transform_3, window_bounds = array<i64: 32, 1>}, {pipeline_mode = #tpu.pipeline_mode<synchronous>, transform_indices = @transform_4, window_bounds = array<i64: 32, 1>}, {pipeline_mode = #tpu.pipeline_mode<synchronous>, transform_indices = @transform_5, window_bounds = array<i64: 32, 1>}, {pipeline_mode = #tpu.pipeline_mode<synchronous>, transform_indices = @transform_6, window_bounds = array<i64: 4, 32>}, {pipeline_mode = #tpu.pipeline_mode<synchronous>, transform_indices = @transform_7, window_bounds = array<i64: 4, 1>}, {transform_indices = @transform_8, window_bounds = array<i64: 1, 4, 256>}]} {
    %c0 = arith.constant 0 : index
    %c0_0 = arith.constant 0 : index
    %0 = vector.load %arg3[%c0, %c0_0] : memref<32x4xf32, #tpu.memory_space<vmem>>, vector<32x4xf32>
    %c0_1 = arith.constant 0 : index
    %c0_2 = arith.constant 0 : index
    %1 = vector.load %arg4[%c0_1, %c0_2] : memref<32x1xf32, #tpu.memory_space<vmem>>, vector<32x1xf32>
    %c0_3 = arith.constant 0 : index
    %c0_4 = arith.constant 0 : index
    %2 = vector.load %arg5[%c0_3, %c0_4] : memref<32x1xf32, #tpu.memory_space<vmem>>, vector<32x1xf32>
    %c0_5 = arith.constant 0 : index
    %c0_6 = arith.constant 0 : index
    %3 = vector.load %arg6[%c0_5, %c0_6] : memref<32x1xf32, #tpu.memory_space<vmem>>, vector<32x1xf32>
    %c0_7 = arith.constant 0 : index
    %c0_8 = arith.constant 0 : index
    %4 = vector.load %arg7[%c0_7, %c0_8] : memref<4x32xf32, #tpu.memory_space<vmem>>, vector<4x32xf32>
    %c0_9 = arith.constant 0 : index
    %c0_10 = arith.constant 0 : index
    %5 = vector.load %arg8[%c0_9, %c0_10] : memref<4x1xf32, #tpu.memory_space<vmem>>, vector<4x1xf32>
    %c0_i32 = arith.constant 0 : i32
    %c1_i32 = arith.constant 1 : i32
    %6 = arith.muli %c0_i32, %c1_i32 : i32
    %c0_i32_11 = arith.constant 0 : i32
    %7 = arith.addi %c0_i32_11, %6 : i32
    %c1_i32_12 = arith.constant 1 : i32
    %8 = arith.muli %arg0, %c1_i32_12 : i32
    %9 = arith.addi %8, %7 : i32
    %10 = arith.index_cast %9 : i32 to index
    %11 = memref.load %arg1[%10] : memref<2xf32, #tpu.memory_space<smem>>
    %12 = arith.mulf %11, %11 : f32
    %cst = arith.constant 2.500000e-01 : f32
    %13 = arith.addf %12, %cst : f32
    %cst_13 = arith.constant 2.500000e-01 : f32
    %14 = arith.divf %cst_13, %13 : f32
    %cst_14 = arith.constant 5.000000e-01 : f32
    %15 = arith.mulf %11, %cst_14 : f32
    %cst_15 = arith.constant 2.500000e-01 : f32
    %16 = arith.addf %12, %cst_15 : f32
    %17 = math.rsqrt %16 : f32
    %18 = arith.mulf %15, %17 : f32
    %cst_16 = arith.constant 2.500000e-01 : f32
    %19 = arith.addf %cst_16, %12 : f32
    %20 = math.rsqrt %19 : f32
    %21 = math.log %11 : f32
    %cst_17 = arith.constant 2.500000e-01 : f32
    %22 = arith.mulf %21, %cst_17 : f32
    %23 = arith.index_cast %7 : i32 to index
    %c0_18 = arith.constant 0 : index
    %c0_19 = arith.constant 0 : index
    %24 = vector.load %arg2[%23, %c0_18, %c0_19] : memref<1x4x256xf32, #tpu.memory_space<vmem>>, vector<1x4x256xf32>
    %25 = vector.shape_cast %24 : vector<1x4x256xf32> to vector<4x256xf32>
    %26 = vector.broadcast %20 : f32 to vector<4x256xf32>
    %27 = arith.mulf %26, %25 : vector<4x256xf32>
    %28 = vector.broadcast %22 : f32 to vector<32x1xf32>
    %29 = arith.mulf %2, %28 : vector<32x1xf32>
    %30 = arith.addf %29, %3 : vector<32x1xf32>
    %31 = arith.negf %30 : vector<32x1xf32>
    %32 = math.exp %31 : vector<32x1xf32>
    %cst_20 = arith.constant 1.000000e+00 : f32
    %33 = vector.broadcast %cst_20 : f32 to vector<32x1xf32>
    %34 = arith.addf %33, %32 : vector<32x1xf32>
    %35 = arith.divf %33, %34 : vector<32x1xf32>
    %36 = arith.mulf %30, %35 : vector<32x1xf32>
    %cst_21 = arith.constant dense<0.000000e+00> : vector<32x256xf32>
    %37 = tpu.matmul %0, %27, %cst_21 {dimension_numbers = #tpu.dot_dimension_numbers<[1], [0], [0], [1], [0, 0, 1, 1], [], []>} : vector<32x4xf32>, vector<4x256xf32>, vector<32x256xf32> -> vector<32x256xf32>
    %38 = vector.broadcast %1 : vector<32x1xf32> to vector<32x256xf32>
    %39 = arith.addf %37, %38 : vector<32x256xf32>
    %40 = vector.broadcast %36 : vector<32x1xf32> to vector<32x256xf32>
    %41 = arith.addf %39, %40 : vector<32x256xf32>
    %42 = arith.negf %41 : vector<32x256xf32>
    %43 = math.exp %42 : vector<32x256xf32>
    %cst_22 = arith.constant 1.000000e+00 : f32
    %44 = vector.broadcast %cst_22 : f32 to vector<32x256xf32>
    %45 = arith.addf %44, %43 : vector<32x256xf32>
    %46 = arith.divf %44, %45 : vector<32x256xf32>
    %47 = arith.mulf %41, %46 : vector<32x256xf32>
    %cst_23 = arith.constant dense<0.000000e+00> : vector<4x256xf32>
    %48 = tpu.matmul %4, %47, %cst_23 {dimension_numbers = #tpu.dot_dimension_numbers<[1], [0], [0], [1], [0, 0, 1, 1], [], []>} : vector<4x32xf32>, vector<32x256xf32>, vector<4x256xf32> -> vector<4x256xf32>
    %49 = vector.broadcast %5 : vector<4x1xf32> to vector<4x256xf32>
    %50 = arith.addf %48, %49 : vector<4x256xf32>
    %51 = vector.broadcast %14 : f32 to vector<4x256xf32>
    %52 = arith.mulf %51, %25 : vector<4x256xf32>
    %53 = vector.broadcast %18 : f32 to vector<4x256xf32>
    %54 = arith.mulf %53, %50 : vector<4x256xf32>
    %55 = arith.addf %52, %54 : vector<4x256xf32>
    %56 = arith.index_cast %7 : i32 to index
    %c0_24 = arith.constant 0 : index
    %c0_25 = arith.constant 0 : index
    %57 = vector.load %arg9[%56, %c0_24, %c0_25] : memref<1x4x256xf32, #tpu.memory_space<vmem>>, vector<1x4x256xf32>
    %58 = vector.shape_cast %57 : vector<1x4x256xf32> to vector<4x256xf32>
    %59 = vector.shape_cast %55 : vector<4x256xf32> to vector<1x4x256xf32>
    tpu.vector_store %arg9[%56, %c0_24, %c0_25], %59 {strides = array<i32>} : memref<1x4x256xf32, #tpu.memory_space<vmem>>, vector<1x4x256xf32>,
    %c1_i32_26 = arith.constant 1 : i32
    return
  }
  func.func @transform_0(%arg0: i32) -> i32 {
    %c0_i32 = arith.constant 0 : i32
    %c0_i32_0 = arith.constant 0 : i32
    return %c0_i32 : i32
  }
  func.func @transform_1(%arg0: i32) -> (i32, i32, i32) {
    %c0_i32 = arith.constant 0 : i32
    %c0_i32_0 = arith.constant 0 : i32
    %c0_i32_1 = arith.constant 0 : i32
    return %arg0, %c0_i32, %c0_i32_0 : i32, i32, i32
  }
  func.func @transform_2(%arg0: i32) -> (i32, i32) {
    %c0_i32 = arith.constant 0 : i32
    %c0_i32_0 = arith.constant 0 : i32
    %c0_i32_1 = arith.constant 0 : i32
    return %c0_i32, %c0_i32_0 : i32, i32
  }
  func.func @transform_3(%arg0: i32) -> (i32, i32) {
    %c0_i32 = arith.constant 0 : i32
    %c0_i32_0 = arith.constant 0 : i32
    %c0_i32_1 = arith.constant 0 : i32
    return %c0_i32, %c0_i32_0 : i32, i32
  }
  func.func @transform_4(%arg0: i32) -> (i32, i32) {
    %c0_i32 = arith.constant 0 : i32
    %c0_i32_0 = arith.constant 0 : i32
    %c0_i32_1 = arith.constant 0 : i32
    return %c0_i32, %c0_i32_0 : i32, i32
  }
  func.func @transform_5(%arg0: i32) -> (i32, i32) {
    %c0_i32 = arith.constant 0 : i32
    %c0_i32_0 = arith.constant 0 : i32
    %c0_i32_1 = arith.constant 0 : i32
    return %c0_i32, %c0_i32_0 : i32, i32
  }
  func.func @transform_6(%arg0: i32) -> (i32, i32) {
    %c0_i32 = arith.constant 0 : i32
    %c0_i32_0 = arith.constant 0 : i32
    %c0_i32_1 = arith.constant 0 : i32
    return %c0_i32, %c0_i32_0 : i32, i32
  }
  func.func @transform_7(%arg0: i32) -> (i32, i32) {
    %c0_i32 = arith.constant 0 : i32
    %c0_i32_0 = arith.constant 0 : i32
    %c0_i32_1 = arith.constant 0 : i32
    return %c0_i32, %c0_i32_0 : i32, i32
  }
  func.func @transform_8(%arg0: i32) -> (i32, i32, i32) {
    %c0_i32 = arith.constant 0 : i32
    %c0_i32_0 = arith.constant 0 : i32
    %c0_i32_1 = arith.constant 0 : i32
    return %arg0, %c0_i32, %c0_i32_0 : i32, i32, i32
  }
}

</mosaic_0001>

<llo_original>
// kernel: tpu_custom_call.1
$region0: #{tpu_custom_call.1}
  #allocation0 [shape = 'u32[]', space=smem, size = 0x4, offset = 0x4, fixed_abs, tag = 'smem constant byte address 0x4 - core index']
  #allocation1 [shape = 'u32[144,128]{1,0:T(1,128)}', space=vmem, size = 0x12000, scoped, tag = 'internal scratch']
  %s0 = inlined_call_operand.vmem [shape: f32[2], index: 0, kind: input, shape index: {}]
  %s1 = inlined_call_operand.vmem [shape: f32[2,4,256], index: 1, kind: input, shape index: {}]
  %s2 = inlined_call_operand.vmem [shape: f32[32,4], index: 2, kind: input, shape index: {}]
  %s3 = inlined_call_operand.vmem [shape: f32[32,1], index: 3, kind: input, shape index: {}]
  %s4 = inlined_call_operand.vmem [shape: f32[32,1], index: 4, kind: input, shape index: {}]
  %s5 = inlined_call_operand.vmem [shape: f32[32,1], index: 5, kind: input, shape index: {}]
  %s6 = inlined_call_operand.vmem [shape: f32[4,32], index: 6, kind: input, shape index: {}]
  %s7 = inlined_call_operand.vmem [shape: f32[4,1], index: 7, kind: input, shape index: {}]
  %s8 = inlined_call_operand.hbm [shape: f32[2,4,256], index: 8, kind: output, shape index: {}]
  %s9 = sld [smem:[#allocation0]]
  $region69: #{tpu_custom_call.1} parent=0
    _
  %s11 = ssub.s32 1, %s9
  %s12 = scalar_select 0, %s11, %s9
  $region1: #{tpu_custom_call.1} parent=0
    #allocation2 [shape = 'u8[512]{0}', space=smem, size = 0x200, scoped, tag = 'input window, operand 0, single buffered']
    #allocation3 [shape = 's32[2]{0}', space=sflag, size = 0x8, scoped, tag = 'scoped memory for tpu_custom_call.1']
    #allocation4 [shape = 's32[2]{0}', space=sflag, size = 0x8, scoped, tag = 'scoped memory for tpu_custom_call.1']
    #allocation5 [shape = 'u8[8192]{0}', space=vmem, size = 0x2000, scoped, tag = 'output window, operand 0']
    %13 = vsyncpa [#allocation4], 0
    %14 = vsyncpa [#allocation3], 0
    %s15 = scalar_lea.sflag [#allocation3], 1
    %16 = vsyncpa %s15, 0
    loop: start=0, step=1, limit=4
    $region2: #{tpu_custom_call.1} parent=1 // loop_pre_header
      _
    $region3: #{tpu_custom_call.1} parent=1 // loop_header
      %s18 = sphi 0, %s22
      %p19 = scmp.ge.s32.totalorder %s18, 4
      %s26 = sphi 0, %s26
      %s28 = sphi 0, %s26
      %s29 = sphi 0, %s28
      %s43 = sphi 0, %s29
      %s49 = sphi 0, %s51
      %s52 = sphi 0, %s49
      %s53 = sphi 0, %s52
      %s69 = sphi 0, %s53
      %s73 = sphi 0, %s73
      %s75 = sphi 0, %s73
      %s76 = sphi 0, %s75
      %s90 = sphi 0, %s76
      %s94 = sphi 0, %s94
      %s96 = sphi 0, %s94
      %s97 = sphi 0, %s96
      %s111 = sphi 0, %s97
      %s115 = sphi 0, %s115
      %s117 = sphi 0, %s115
      %s118 = sphi 0, %s117
      %s132 = sphi 0, %s118
      %s136 = sphi 0, %s136
      %s138 = sphi 0, %s136
      %s139 = sphi 0, %s138
      %s153 = sphi 0, %s139
      %s157 = sphi 0, %s157
      %s159 = sphi 0, %s157
      %s160 = sphi 0, %s159
      %s174 = sphi 0, %s160
      %s178 = sphi 0, %s178
      %s180 = sphi 0, %s178
      %s181 = sphi 0, %s180
      %s195 = sphi 0, %s181
      %s201 = sphi 0, %s203
      %s204 = sphi 0, %s201
      %s205 = sphi 0, %s204
      %s221 = sphi 0, %s205
    $region4: #{tpu_custom_call.1} parent=1 // loop_header_branch
      %21 = sbr.rel (%p19) target = $region8
    $region5: #{tpu_custom_call.1} parent=1 // loop_body
      %s23 = ssub.s32 %s18, 1
      %s24 = ssub.s32 %s18, 2
      %s25 = sadd.s32 %s18, 1
      %s27 = sadd.s32 %s26, 1
      %p30 = scmp.eq.s32.totalorder %s18, 1
      %p31 = scmp.ne.s32.totalorder %s26, %s28
      %p32 = scmp.eq.s32.totalorder %s18, 0
      %p33 = por %p31, %p32
      %p34 = scmp.ne.s32.totalorder %s26, %s28
      %p35 = scmp.eq.s32.totalorder %s23, 1
      %p36 = por %p34, %p35
      %p37 = scmp.ne.s32.totalorder %s28, %s29
      %p38 = scmp.eq.s32.totalorder %s23, 0
      %p39 = por %p37, %p38
      %p40 = scmp.ne.s32.totalorder %s28, %s29
      %p41 = scmp.eq.s32.totalorder %s24, 1
      %p42 = por %p40, %p41
      %p44 = scmp.ne.s32.totalorder %s29, %s43
      %p45 = scmp.eq.s32.totalorder %s24, 0
      %p46 = por %p44, %p45
      %s47 = ssub.s32 %s18, %s25
      %p48 = scmp.eq.s32.totalorder %s47, 0
      %s50 = sadd.s32 %s49, 1
      %s51 = scalar_select %p48, %s49, %s50
      %p54 = pneg %p48
      %p55 = scmp.eq.s32.totalorder %s18, 1
      %p56 = por %p54, %p55
      %p57 = scmp.ne.s32.totalorder %s49, %s52
      %p58 = scmp.eq.s32.totalorder %s18, 0
      %p59 = por %p57, %p58
      %p60 = scmp.ne.s32.totalorder %s49, %s52
      %p61 = scmp.eq.s32.totalorder %s23, 1
      %p62 = por %p60, %p61
      %p63 = scmp.ne.s32.totalorder %s52, %s53
      %p64 = scmp.eq.s32.totalorder %s23, 0
      %p65 = por %p63, %p64
      %p66 = scmp.ne.s32.totalorder %s52, %s53
      %p67 = scmp.eq.s32.totalorder %s24, 1
      %p68 = por %p66, %p67
      %p70 = scmp.ne.s32.totalorder %s53, %s69
      %p71 = scmp.eq.s32.totalorder %s24, 0
      %p72 = por %p70, %p71
      %s74 = sadd.s32 %s73, 1
      %p77 = scmp.eq.s32.totalorder %s18, 1
      %p78 = scmp.ne.s32.totalorder %s73, %s75
      %p79 = scmp.eq.s32.totalorder %s18, 0
      %p80 = por %p78, %p79
      %p81 = scmp.ne.s32.totalorder %s73, %s75
      %p82 = scmp.eq.s32.totalorder %s23, 1
      %p83 = por %p81, %p82
      %p84 = scmp.ne.s32.totalorder %s75, %s76
      %p85 = scmp.eq.s32.totalorder %s23, 0
      %p86 = por %p84, %p85
      %p87 = scmp.ne.s32.totalorder %s75, %s76
      %p88 = scmp.eq.s32.totalorder %s24, 1
      %p89 = por %p87, %p88
      %p91 = scmp.ne.s32.totalorder %s76, %s90
      %p92 = scmp.eq.s32.totalorder %s24, 0
      %p93 = por %p91, %p92
      %s95 = sadd.s32 %s94, 1
      %p98 = scmp.eq.s32.totalorder %s18, 1
      %p99 = scmp.ne.s32.totalorder %s94, %s96
      %p100 = scmp.eq.s32.totalorder %s18, 0
      %p101 = por %p99, %p100
      %p102 = scmp.ne.s32.totalorder %s94, %s96
      %p103 = scmp.eq.s32.totalorder %s23, 1
      %p104 = por %p102, %p103
      %p105 = scmp.ne.s32.totalorder %s96, %s97
      %p106 = scmp.eq.s32.totalorder %s23, 0
      %p107 = por %p105, %p106
      %p108 = scmp.ne.s32.totalorder %s96, %s97
      %p109 = scmp.eq.s32.totalorder %s24, 1
      %p110 = por %p108, %p109
      %p112 = scmp.ne.s32.totalorder %s97, %s111
      %p113 = scmp.eq.s32.totalorder %s24, 0
      %p114 = por %p112, %p113
      %s116 = sadd.s32 %s115, 1
      %p119 = scmp.eq.s32.totalorder %s18, 1
      %p120 = scmp.ne.s32.totalorder %s115, %s117
      %p121 = scmp.eq.s32.totalorder %s18, 0
      %p122 = por %p120, %p121
      %p123 = scmp.ne.s32.totalorder %s115, %s117
      %p124 = scmp.eq.s32.totalorder %s23, 1
      %p125 = por %p123, %p124
      %p126 = scmp.ne.s32.totalorder %s117, %s118
      %p127 = scmp.eq.s32.totalorder %s23, 0
      %p128 = por %p126, %p127
      %p129 = scmp.ne.s32.totalorder %s117, %s118
      %p130 = scmp.eq.s32.totalorder %s24, 1
      %p131 = por %p129, %p130
      %p133 = scmp.ne.s32.totalorder %s118, %s132
      %p134 = scmp.eq.s32.totalorder %s24, 0
      %p135 = por %p133, %p134
      %s137 = sadd.s32 %s136, 1
      %p140 = scmp.eq.s32.totalorder %s18, 1
      %p141 = scmp.ne.s32.totalorder %s136, %s138
      %p142 = scmp.eq.s32.totalorder %s18, 0
      %p143 = por %p141, %p142
      %p144 = scmp.ne.s32.totalorder %s136, %s138
      %p145 = scmp.eq.s32.totalorder %s23, 1
      %p146 = por %p144, %p145
      %p147 = scmp.ne.s32.totalorder %s138, %s139
      %p148 = scmp.eq.s32.totalorder %s23, 0
      %p149 = por %p147, %p148
      %p150 = scmp.ne.s32.totalorder %s138, %s139
      %p151 = scmp.eq.s32.totalorder %s24, 1
      %p152 = por %p150, %p151
      %p154 = scmp.ne.s32.totalorder %s139, %s153
      %p155 = scmp.eq.s32.totalorder %s24, 0
      %p156 = por %p154, %p155
      %s158 = sadd.s32 %s157, 1
      %p161 = scmp.eq.s32.totalorder %s18, 1
      %p162 = scmp.ne.s32.totalorder %s157, %s159
      %p163 = scmp.eq.s32.totalorder %s18, 0
      %p164 = por %p162, %p163
      %p165 = scmp.ne.s32.totalorder %s157, %s159
      %p166 = scmp.eq.s32.totalorder %s23, 1
      %p167 = por %p165, %p166
      %p168 = scmp.ne.s32.totalorder %s159, %s160
      %p169 = scmp.eq.s32.totalorder %s23, 0
      %p170 = por %p168, %p169
      %p171 = scmp.ne.s32.totalorder %s159, %s160
      %p172 = scmp.eq.s32.totalorder %s24, 1
      %p173 = por %p171, %p172
      %p175 = scmp.ne.s32.totalorder %s160, %s174
      %p176 = scmp.eq.s32.totalorder %s24, 0
      %p177 = por %p175, %p176
      %s179 = sadd.s32 %s178, 1
      %p182 = scmp.eq.s32.totalorder %s18, 1
      %p183 = scmp.ne.s32.totalorder %s178, %s180
      %p184 = scmp.eq.s32.totalorder %s18, 0
      %p185 = por %p183, %p184
      %p186 = scmp.ne.s32.totalorder %s178, %s180
      %p187 = scmp.eq.s32.totalorder %s23, 1
      %p188 = por %p186, %p187
      %p189 = scmp.ne.s32.totalorder %s180, %s181
      %p190 = scmp.eq.s32.totalorder %s23, 0
      %p191 = por %p189, %p190
      %p192 = scmp.ne.s32.totalorder %s180, %s181
      %p193 = scmp.eq.s32.totalorder %s24, 1
      %p194 = por %p192, %p193
      %p196 = scmp.ne.s32.totalorder %s181, %s195
      %p197 = scmp.eq.s32.totalorder %s24, 0
      %p198 = por %p196, %p197
      %s199 = ssub.s32 %s18, %s25
      %p200 = scmp.eq.s32.totalorder %s199, 0
      %s202 = sadd.s32 %s201, 1
      %s203 = scalar_select %p200, %s201, %s202
      %p206 = pneg %p200
      %p207 = scmp.eq.s32.totalorder %s18, 1
      %p208 = por %p206, %p207
      %p209 = scmp.ne.s32.totalorder %s201, %s204
      %p210 = scmp.eq.s32.totalorder %s18, 0
      %p211 = por %p209, %p210
      %p212 = scmp.ne.s32.totalorder %s201, %s204
      %p213 = scmp.eq.s32.totalorder %s23, 1
      %p214 = por %p212, %p213
      %p215 = scmp.ne.s32.totalorder %s204, %s205
      %p216 = scmp.eq.s32.totalorder %s23, 0
      %p217 = por %p215, %p216
      %p218 = scmp.ne.s32.totalorder %s204, %s205
      %p219 = scmp.eq.s32.totalorder %s24, 1
      %p220 = por %p218, %p219
      %p222 = scmp.ne.s32.totalorder %s205, %s221
      %p223 = scmp.eq.s32.totalorder %s24, 0
      %p224 = por %p222, %p223
      %p225 = scmp.le.s32.totalorder 1, %s18
      %p226 = scmp.lt.s32.totalorder %s18, 3
      %p227 = pnand %p225, %p226
      %p228 = pneg %p227
      // Predicated region
      $region9: #{tpu_custom_call.1} parent=5 // pred_check
        _
      $region10: #{tpu_custom_call.1} parent=5 // pred_check_branch
        %230 = sbr.rel (%p227) target = $region12
      $region11: #{tpu_custom_call.1} parent=5 // pred_region
        %s231 = ssub.s32 %s18, 1
        // Predicated region
        $region13: #{tpu_custom_call.1} parent=11 // pred_check
          %p232 = pneg %p39
        $region14: #{tpu_custom_call.1} parent=11 // pred_check_branch
          %234 = sbr.rel (%p232) target = $region16
        $region15: #{tpu_custom_call.1} parent=11 // pred_region
          %s236 = ssub.s32 16, 16
          %237 = vsyncadd [#allocation4], %s236
          %s239 = sshll.u32 %s0, 4
          %s240 = int_to_ptr.vmem [resolvable:$true] %s239
          %242 = dma.vmem_to_smem %s240, 16, [#allocation2], [#allocation4]
        $region16: #{tpu_custom_call.1} parent=11 // pred_fallthru
          _
        // Predicated region
        $region17: #{tpu_custom_call.1} parent=11 // pred_check
          %p243 = pneg %p86
        $region18: #{tpu_custom_call.1} parent=11 // pred_check_branch
          %245 = sbr.rel (%p243) target = $region20
        $region19: #{tpu_custom_call.1} parent=11 // pred_region
          _
        $region20: #{tpu_custom_call.1} parent=11 // pred_fallthru
          _
        // Predicated region
        $region21: #{tpu_custom_call.1} parent=11 // pred_check
          %p246 = pneg %p107
        $region22: #{tpu_custom_call.1} parent=11 // pred_check_branch
          %248 = sbr.rel (%p246) target = $region24
        $region23: #{tpu_custom_call.1} parent=11 // pred_region
          _
        $region24: #{tpu_custom_call.1} parent=11 // pred_fallthru
          _
        // Predicated region
        $region25: #{tpu_custom_call.1} parent=11 // pred_check
          %p249 = pneg %p128
        $region26: #{tpu_custom_call.1} parent=11 // pred_check_branch
          %251 = sbr.rel (%p249) target = $region28
        $region27: #{tpu_custom_call.1} parent=11 // pred_region
          _
        $region28: #{tpu_custom_call.1} parent=11 // pred_fallthru
          _
        // Predicated region
        $region29: #{tpu_custom_call.1} parent=11 // pred_check
          %p252 = pneg %p149
        $region30: #{tpu_custom_call.1} parent=11 // pred_check_branch
          %254 = sbr.rel (%p252) target = $region32
        $region31: #{tpu_custom_call.1} parent=11 // pred_region
          _
        $region32: #{tpu_custom_call.1} parent=11 // pred_fallthru
          _
        // Predicated region
        $region33: #{tpu_custom_call.1} parent=11 // pred_check
          %p255 = pneg %p170
        $region34: #{tpu_custom_call.1} parent=11 // pred_check_branch
          %257 = sbr.rel (%p255) target = $region36
        $region35: #{tpu_custom_call.1} parent=11 // pred_region
          _
        $region36: #{tpu_custom_call.1} parent=11 // pred_fallthru
          _
        // Predicated region
        $region37: #{tpu_custom_call.1} parent=11 // pred_check
          %p258 = pneg %p191
        $region38: #{tpu_custom_call.1} parent=11 // pred_check_branch
          %260 = sbr.rel (%p258) target = $region40
        $region39: #{tpu_custom_call.1} parent=11 // pred_region
          _
        $region40: #{tpu_custom_call.1} parent=11 // pred_fallthru
          _
      $region12: #{tpu_custom_call.1} parent=5 // pred_fallthru
        _
      %p261 = scmp.lt.s32.totalorder %s18, 2
      // Predicated region
      $region41: #{tpu_custom_call.1} parent=5 // pred_check
        %p262 = pneg %p261
      $region42: #{tpu_custom_call.1} parent=5 // pred_check_branch
        %264 = sbr.rel (%p262) target = $region44
      $region43: #{tpu_custom_call.1} parent=5 // pred_region
        // Predicated region
        $region45: #{tpu_custom_call.1} parent=43 // pred_check
          %p265 = pneg %p59
        $region46: #{tpu_custom_call.1} parent=43 // pred_check_branch
          %267 = sbr.rel (%p265) target = $region48
        $region47: #{tpu_custom_call.1} parent=43 // pred_region
          %p268 = scmp.lt.s32.totalorder %s18, 1
          %s269 = scalar_select %p268, %s18, 1
          %s270 = smul.addr %s269, 2
          %s271 = smul.addr %s270, 4
          %s272 = scalar_lea.vmem %s1, %s271
        $region48: #{tpu_custom_call.1} parent=43 // pred_fallthru
          _
      $region44: #{tpu_custom_call.1} parent=5 // pred_fallthru
        _
      %p273 = scmp.le.s32.totalorder 1, %s18
      %p274 = scmp.lt.s32.totalorder %s18, 3
      %p275 = pnand %p273, %p274
      %p276 = pneg %p275
      // Predicated region
      $region49: #{tpu_custom_call.1} parent=5 // pred_check
        _
      $region50: #{tpu_custom_call.1} parent=5 // pred_check_branch
        %278 = sbr.rel (%p275) target = $region52
      $region51: #{tpu_custom_call.1} parent=5 // pred_region
        %s279 = ssub.s32 %s18, 1
        // Predicated region
        $region53: #{tpu_custom_call.1} parent=51 // pred_check
          %p280 = pneg %p39
        $region54: #{tpu_custom_call.1} parent=51 // pred_check_branch
          %282 = sbr.rel (%p280) target = $region56
        $region55: #{tpu_custom_call.1} parent=51 // pred_region
          %283 = dma.done [#allocation4], 16
        $region56: #{tpu_custom_call.1} parent=51 // pred_fallthru
          _
        %284 = sfence
        %p285 = pneg %p39
        %p286 = pneg %p36
        %p287 = scmp.lt.s32.totalorder %s23, 1
        %s288 = scalar_select %p287, %s23, 1
        %s289 = smul.addr %s288, 2
        %s290 = smul.addr %s289, 4
        %s291 = scalar_lea.vmem %s1, %s290
        %p292 = pneg %p65
        %p293 = pneg %p62
        %p294 = pneg %p86
        %p295 = pneg %p83
        %p296 = pneg %p107
        %p297 = pneg %p104
        %p298 = pneg %p128
        %p299 = pneg %p125
        %p300 = pneg %p149
        %p301 = pneg %p146
        %p302 = pneg %p170
        %p303 = pneg %p167
        %p304 = pneg %p191
        %p305 = pneg %p188
        %p306 = pneg %p217
        %p307 = pneg %p214
        %s308 = sand.u32 %s204, 1
        %s309 = scalar_lea.sflag [#allocation3], %s308
        %s310 = sand.u32 %s204, 1
        %s311 = smul.addr %s310, 8
        %s312 = scalar_lea.vmem [#allocation5], %s311
        %p313 = scmp.lt.s32.totalorder %s23, 1
        %s314 = scalar_select %p313, %s23, 1
        %s315 = smul.addr %s314, 2
        %s316 = smul.addr %s315, 4
        %s317 = scalar_lea.vmem %s1, %s316
        %v318 = vld [vmem:[%s2] sm:$0xff]
        %v319 = vld [vmem:[%s2 + $0x8] sm:$0xff]
        %v320 = vld [vmem:[%s2 + $0x10] sm:$0xff]
        %v321 = vld [vmem:[%s2 + $0x18] sm:$0xff]
        %v322 = vld [vmem:[%s3] sm:$0xff]
        %v323 = vld [vmem:[%s3 + $0x8] sm:$0xff]
        %v324 = vld [vmem:[%s3 + $0x10] sm:$0xff]
        %v325 = vld [vmem:[%s3 + $0x18] sm:$0xff]
        %v326 = vld [vmem:[%s4] sm:$0xff]
        %v327 = vld [vmem:[%s4 + $0x8] sm:$0xff]
        %v328 = vld [vmem:[%s4 + $0x10] sm:$0xff]
        %v329 = vld [vmem:[%s4 + $0x18] sm:$0xff]
        %v330 = vld [vmem:[%s5] sm:$0xff]
        %v331 = vld [vmem:[%s5 + $0x8] sm:$0xff]
        %v332 = vld [vmem:[%s5 + $0x10] sm:$0xff]
        %v333 = vld [vmem:[%s5 + $0x18] sm:$0xff]
        %v334 = vld [vmem:[%s6] sm:$0xf]
        %v335 = vld [vmem:[%s7] sm:$0xf]
        %s336 = sld [smem:[#allocation2 + %s23]]
        %s337 = smul.f32 %s336, %s336
        %s338 = sadd.f32 %s337, 0.25
        %v339 = vstv %s338
        %v340 = vrcp.pop %v339
        %s341 = vtos %v340
        %s342 = smul.f32 0.25, %s341
        %s343 = smul.f32 %s336, 0.5
        %v344 = vstv %s338
        %v345 = vrsqrt.pop %v344
        %s346 = vtos %v345
        %s347 = smul.f32 %s343, %s346
        %v348 = vstv %s336
        %v349 = vlog2.pop %v348
        %v350 = vmul.f32 %v349, 0.6931472
        %s351 = vtos %v350
        %s352 = smul.f32 %s351, 0.25
        %v353 = vld [vmem:[%s317] sm:$0xff]
        %v354 = vstv %s346
        %v355 = vmul.f32 %v354, %v353
        %v356 = vstv %s352
        %v357 = vmul.f32 %v326, %v356
        %v358 = vmul.f32 %v327, %v356
        %v359 = vmul.f32 %v328, %v356
        %v360 = vmul.f32 %v329, %v356
        %v361 = vadd.f32 %v357, %v330
        %v362 = vadd.f32 %v358, %v331
        %v363 = vadd.f32 %v359, %v332
        %v364 = vadd.f32 %v360, %v333
        %v365 = vxor.u32 %v361, 2147483648
        %v366 = vxor.u32 %v362, 2147483648
        %v367 = vxor.u32 %v363, 2147483648
        %v368 = vxor.u32 %v364, 2147483648
        %v369 = vmul.f32 %v365, 1.442695
        %v370 = vpow.pop %v369
        %v371 = vmul.f32 %v366, 1.442695
        %v372 = vpow.pop %v371
        %v373 = vmul.f32 %v367, 1.442695
        %v374 = vpow.pop %v373
        %v375 = vmul.f32 %v368, 1.442695
        %v376 = vpow.pop %v375
        %v377 = vadd.f32 %v370, 1.0
        %v378 = vadd.f32 %v372, 1.0
        %v379 = vadd.f32 %v374, 1.0
        %v380 = vadd.f32 %v376, 1.0
        %v381 = vrcp.pop %v377
        %v382 = vmul.f32 1.0, %v381
        %v383 = vrcp.pop %v378
        %v384 = vmul.f32 1.0, %v383
        %v385 = vrcp.pop %v379
        %v386 = vmul.f32 1.0, %v385
        %v387 = vrcp.pop %v380
        %v388 = vmul.f32 1.0, %v387
        %v389 = vmul.f32 %v361, %v382
        %v390 = vmul.f32 %v362, %v384
        %v391 = vmul.f32 %v363, %v386
        %v392 = vmul.f32 %v364, %v388
        %394 = vset.pattern.permute.xlu0 0
        %395 = vperm.xlu0 %394, %v322
        %v396 = vpop.permute.xlu0 %395
        %399 = vset.pattern.permute.xlu0 0
        %400 = vperm.xlu0 %399, %v323
        %v401 = vpop.permute.xlu0 %400
        %404 = vset.pattern.permute.xlu0 0
        %405 = vperm.xlu0 %404, %v324
        %v406 = vpop.permute.xlu0 %405
        %409 = vset.pattern.permute.xlu0 0
        %410 = vperm.xlu0 %409, %v325
        %v411 = vpop.permute.xlu0 %410
        %v414 = vcombine.high %v355, %v355
        %vm415 = vcmask 31744
        %v417 = vsel %vm415, %v318, 0
        %v420 = vsel %vm415, %v319, 0
        %v423 = vsel %vm415, %v320, 0
        %v426 = vsel %vm415, %v321, 0
        %vm428 = vcmask 1043456
        %v429 = vsel %vm428, %v355, 0
        %v431 = vsel %vm428, %v414, 0
        %433 = vmatprep.subr.mxu0 %v431
        %434 = vmatpush1.msra.mxu0 %v429
        %435 = vmatprep.subr.mxu0 0.0
        %436 = vmatpush1.msra.mxu0 0.0
        %437 = vmatprep.subr.mxu0 0.0
        %438 = vmatpush1.msra.mxu0 0.0
        %439 = vmatprep.subr.mxu0 0.0
        %440 = vmatpush1.msra.mxu0 0.0
        %441 = vmatprep.subr.mxu0 0.0
        %442 = vmatpush1.msra.mxu0 0.0
        %443 = vmatprep.subr.mxu0 0.0
        %444 = vmatpush1.msra.mxu0 0.0
        %445 = vmatprep.subr.mxu0 0.0
        %446 = vmatpush1.msra.mxu0 0.0
        %447 = vmatprep.subr.mxu0 0.0
        %448 = vmatpush1.msra.mxu0 0.0
        %449 = vmatprep.subr.mxu0 0.0
        %450 = vmatpush1.msra.mxu0 0.0
        %451 = vmatprep.subr.mxu0 0.0
        %452 = vmatpush1.msra.mxu0 0.0
        %453 = vmatprep.subr.mxu0 0.0
        %454 = vmatpush1.msra.mxu0 0.0
        %455 = vmatprep.subr.mxu0 0.0
        %456 = vmatpush1.msra.mxu0 0.0
        %457 = vmatprep.subr.mxu0 0.0
        %458 = vmatpush1.msra.mxu0 0.0
        %459 = vmatprep.subr.mxu0 0.0
        %460 = vmatpush1.msra.mxu0 0.0
        %461 = vmatprep.subr.mxu0 0.0
        %462 = vmatpush1.msra.mxu0 0.0
        %463 = vmatprep.subr.mxu0 0.0
        %464 = vmatpush1.msra.mxu0 0.0
        %465 = vmatprep.subr.mxu0 0.0
        %466 = vmatpush1.msra.mxu0 0.0
        %467 = vmatprep.subr.mxu0 0.0
        %468 = vmatpush1.msra.mxu0 0.0
        %469 = vmatprep.subr.mxu0 0.0
        %470 = vmatpush1.msra.mxu0 0.0
        %471 = vmatprep.subr.mxu0 0.0
        %472 = vmatpush1.msra.mxu0 0.0
        %473 = vmatprep.subr.mxu0 0.0
        %474 = vmatpush1.msra.mxu0 0.0
        %475 = vmatprep.subr.mxu0 0.0
        %476 = vmatpush1.msra.mxu0 0.0
        %477 = vmatprep.subr.mxu0 0.0
        %478 = vmatpush1.msra.mxu0 0.0
        %479 = vmatprep.subr.mxu0 0.0
        %480 = vmatpush1.msra.mxu0 0.0
        %481 = vmatprep.subr.mxu0 0.0
        %482 = vmatpush1.msra.mxu0 0.0
        %483 = vmatprep.subr.mxu0 0.0
        %484 = vmatpush1.msra.mxu0 0.0
        %485 = vmatprep.subr.mxu0 0.0
        %486 = vmatpush1.msra.mxu0 0.0
        %487 = vmatprep.subr.mxu0 0.0
        %488 = vmatpush1.msra.mxu0 0.0
        %489 = vmatprep.subr.mxu0 0.0
        %490 = vmatpush1.msra.mxu0 0.0
        %491 = vmatprep.subr.mxu0 0.0
        %492 = vmatpush1.msra.mxu0 0.0
        %493 = vmatprep.subr.mxu0 0.0
        %494 = vmatpush1.msra.mxu0 0.0
        %495 = vmatprep.subr.mxu0 0.0
        %496 = vmatpush1.msra.mxu0 0.0
        %497 = vmatprep.mubr.f32.mxu0 0.0
        %498 = vmatmul.mubr.f32.gmra.mrb[0].mxu0 %v417
        %v499 = vpop.f32.mrb[0].mxu0
        %v500 = vadd.f32 %v396, %v499
        %v501 = vpop.f32.mrb[0].mxu0
        %v502 = vadd.f32 %v396, %v501
        %503 = vmatprep.mubr.f32.mxu0 0.0
        %504 = vmatmul.mubr.f32.gmra.mrb[0].mxu0 %v420
        %v505 = vpop.f32.mrb[0].mxu0
        %v506 = vadd.f32 %v401, %v505
        %v507 = vpop.f32.mrb[0].mxu0
        %v508 = vadd.f32 %v401, %v507
        %509 = vmatprep.mubr.f32.mxu0 0.0
        %510 = vmatmul.mubr.f32.gmra.mrb[0].mxu0 %v423
        %v511 = vpop.f32.mrb[0].mxu0
        %v512 = vadd.f32 %v406, %v511
        %v513 = vpop.f32.mrb[0].mxu0
        %v514 = vadd.f32 %v406, %v513
        %515 = vmatprep.mubr.f32.mxu0 0.0
        %516 = vmatmul.mubr.f32.gmra.mrb[0].mxu0 %v426
        %v517 = vpop.f32.mrb[0].mxu0
        %v518 = vadd.f32 %v411, %v517
        %v519 = vpop.f32.mrb[0].mxu0
        %v520 = vadd.f32 %v411, %v519
        %521 = vdwg.mxu0
        %523 = vset.pattern.permute.xlu0 0
        %524 = vperm.xlu0 %523, %v389
        %v525 = vpop.permute.xlu0 %524
        %528 = vset.pattern.permute.xlu0 0
        %529 = vperm.xlu0 %528, %v390
        %v530 = vpop.permute.xlu0 %529
        %533 = vset.pattern.permute.xlu0 0
        %534 = vperm.xlu0 %533, %v391
        %v535 = vpop.permute.xlu0 %534
        %538 = vset.pattern.permute.xlu0 0
        %539 = vperm.xlu0 %538, %v392
        %v540 = vpop.permute.xlu0 %539
        %v542 = vadd.f32 %v500, %v525
        %v543 = vadd.f32 %v502, %v525
        %v544 = vadd.f32 %v506, %v530
        %v545 = vadd.f32 %v508, %v530
        %v546 = vadd.f32 %v512, %v535
        %v547 = vadd.f32 %v514, %v535
        %v548 = vadd.f32 %v518, %v540
        %v549 = vadd.f32 %v520, %v540
        %v550 = vxor.u32 %v542, 2147483648
        %v551 = vxor.u32 %v543, 2147483648
        %v552 = vxor.u32 %v544, 2147483648
        %v553 = vxor.u32 %v545, 2147483648
        %v554 = vxor.u32 %v546, 2147483648
        %v555 = vxor.u32 %v547, 2147483648
        %v556 = vxor.u32 %v548, 2147483648
        %v557 = vxor.u32 %v549, 2147483648
        %v558 = vmul.f32 %v550, 1.442695
        %v559 = vpow.pop %v558
        %v560 = vmul.f32 %v551, 1.442695
        %v561 = vpow.pop %v560
        %v562 = vmul.f32 %v552, 1.442695
        %v563 = vpow.pop %v562
        %v564 = vmul.f32 %v553, 1.442695
        %v565 = vpow.pop %v564
        %v566 = vmul.f32 %v554, 1.442695
        %v567 = vpow.pop %v566
        %v568 = vmul.f32 %v555, 1.442695
        %v569 = vpow.pop %v568
        %v570 = vmul.f32 %v556, 1.442695
        %v571 = vpow.pop %v570
        %v572 = vmul.f32 %v557, 1.442695
        %v573 = vpow.pop %v572
        %v574 = vadd.f32 %v559, 1.0
        %v575 = vadd.f32 %v561, 1.0
        %v576 = vadd.f32 %v563, 1.0
        %v577 = vadd.f32 %v565, 1.0
        %v578 = vadd.f32 %v567, 1.0
        %v579 = vadd.f32 %v569, 1.0
        %v580 = vadd.f32 %v571, 1.0
        %v581 = vadd.f32 %v573, 1.0
        %v582 = vrcp.pop %v574
        %v583 = vmul.f32 1.0, %v582
        %v584 = vrcp.pop %v575
        %v585 = vmul.f32 1.0, %v584
        %v586 = vrcp.pop %v576
        %v587 = vmul.f32 1.0, %v586
        %v588 = vrcp.pop %v577
        %v589 = vmul.f32 1.0, %v588
        %v590 = vrcp.pop %v578
        %v591 = vmul.f32 1.0, %v590
        %v592 = vrcp.pop %v579
        %v593 = vmul.f32 1.0, %v592
        %v594 = vrcp.pop %v580
        %v595 = vmul.f32 1.0, %v594
        %v596 = vrcp.pop %v581
        %v597 = vmul.f32 1.0, %v596
        %v598 = vmul.f32 %v542, %v583
        %v599 = vmul.f32 %v543, %v585
        %v600 = vmul.f32 %v544, %v587
        %v601 = vmul.f32 %v545, %v589
        %v602 = vmul.f32 %v546, %v591
        %v603 = vmul.f32 %v547, %v593
        %v604 = vmul.f32 %v548, %v595
        %v605 = vmul.f32 %v549, %v597
        %607 = vset.pattern.permute.xlu0 0
        %608 = vperm.xlu0 %607, %v335
        %v609 = vpop.permute.xlu0 %608
        %vm611 = vcmask 261120
        %v613 = vsel %vm611, %v334, 0
        %615 = vmatprep.subr.mxu0 %v599
        %616 = vmatpush1.msra.mxu0 %v598
        %617 = vmatprep.subr.mxu0 %v601
        %618 = vmatpush1.msra.mxu0 %v600
        %619 = vmatprep.subr.mxu0 %v603
        %620 = vmatpush1.msra.mxu0 %v602
        %621 = vmatprep.subr.mxu0 %v605
        %622 = vmatpush1.msra.mxu0 %v604
        %623 = vmatprep.subr.mxu0 0.0
        %624 = vmatpush1.msra.mxu0 0.0
        %625 = vmatprep.subr.mxu0 0.0
        %626 = vmatpush1.msra.mxu0 0.0
        %627 = vmatprep.subr.mxu0 0.0
        %628 = vmatpush1.msra.mxu0 0.0
        %629 = vmatprep.subr.mxu0 0.0
        %630 = vmatpush1.msra.mxu0 0.0
        %631 = vmatprep.subr.mxu0 0.0
        %632 = vmatpush1.msra.mxu0 0.0
        %633 = vmatprep.subr.mxu0 0.0
        %634 = vmatpush1.msra.mxu0 0.0
        %635 = vmatprep.subr.mxu0 0.0
        %636 = vmatpush1.msra.mxu0 0.0
        %637 = vmatprep.subr.mxu0 0.0
        %638 = vmatpush1.msra.mxu0 0.0
        %639 = vmatprep.subr.mxu0 0.0
        %640 = vmatpush1.msra.mxu0 0.0
        %641 = vmatprep.subr.mxu0 0.0
        %642 = vmatpush1.msra.mxu0 0.0
        %643 = vmatprep.subr.mxu0 0.0
        %644 = vmatpush1.msra.mxu0 0.0
        %645 = vmatprep.subr.mxu0 0.0
        %646 = vmatpush1.msra.mxu0 0.0
        %647 = vmatprep.subr.mxu0 0.0
        %648 = vmatpush1.msra.mxu0 0.0
        %649 = vmatprep.subr.mxu0 0.0
        %650 = vmatpush1.msra.mxu0 0.0
        %651 = vmatprep.subr.mxu0 0.0
        %652 = vmatpush1.msra.mxu0 0.0
        %653 = vmatprep.subr.mxu0 0.0
        %654 = vmatpush1.msra.mxu0 0.0
        %655 = vmatprep.subr.mxu0 0.0
        %656 = vmatpush1.msra.mxu0 0.0
        %657 = vmatprep.subr.mxu0 0.0
        %658 = vmatpush1.msra.mxu0 0.0
        %659 = vmatprep.subr.mxu0 0.0
        %660 = vmatpush1.msra.mxu0 0.0
        %661 = vmatprep.subr.mxu0 0.0
        %662 = vmatpush1.msra.mxu0 0.0
        %663 = vmatprep.subr.mxu0 0.0
        %664 = vmatpush1.msra.mxu0 0.0
        %665 = vmatprep.subr.mxu0 0.0
        %666 = vmatpush1.msra.mxu0 0.0
        %667 = vmatprep.subr.mxu0 0.0
        %668 = vmatpush1.msra.mxu0 0.0
        %669 = vmatprep.subr.mxu0 0.0
        %670 = vmatpush1.msra.mxu0 0.0
        %671 = vmatprep.subr.mxu0 0.0
        %672 = vmatpush1.msra.mxu0 0.0
        %673 = vmatprep.subr.mxu0 0.0
        %674 = vmatpush1.msra.mxu0 0.0
        %675 = vmatprep.subr.mxu0 0.0
        %676 = vmatpush1.msra.mxu0 0.0
        %677 = vmatprep.subr.mxu0 0.0
        %678 = vmatpush1.msra.mxu0 0.0
        %679 = vmatprep.mubr.f32.mxu0 0.0
        %680 = vmatmul.mubr.f32.gmra.mrb[0].mxu0 %v613
        %v681 = vpop.f32.mrb[0].mxu0
        %v682 = vadd.f32 %v609, %v681
        %v683 = vpop.f32.mrb[0].mxu0
        %v684 = vadd.f32 %v609, %v683
        %685 = vdwg.mxu0
        %v686 = vstv %s342
        %v687 = vmul.f32 %v686, %v353
        %v688 = vstv %s347
        %v689 = vmul.f32 %v688, %v682
        %v690 = vmul.f32 %v688, %v684
        %v693 = vcombine.low %v689, %v690
        %v695 = vadd.f32 %v687, %v693
        %696 = vst [vmem:[%s312] sm:$0xff] %v695
        %s697 = sand.u32 %s204, 1
        %s698 = scalar_lea.sflag [#allocation3], %s697
        %s699 = sand.u32 %s204, 1
        %s700 = smul.addr %s699, 8
        %s701 = scalar_lea.vmem [#allocation5], %s700
        // Predicated region
        $region57: #{tpu_custom_call.1} parent=51 // pred_check
          %p702 = pneg %p214
        $region58: #{tpu_custom_call.1} parent=51 // pred_check_branch
          %704 = sbr.rel (%p702) target = $region60
        $region59: #{tpu_custom_call.1} parent=51 // pred_region
          %s706 = ssub.s32 128, 128
          %707 = vsyncadd %s698, %s706
          %s708 = smul.addr %s23, 2
          %s709 = smul.addr %s708, 64
          %s710 = scalar_lea.hbm %s8, %s709
          %s712 = sshll.u32 %s701, 4
          %s713 = int_to_ptr.vmem [resolvable:$true] %s712
          %715 = dma.vmem_to_hbm [thread:$0]  %s713, 128, %s710, %s698
        $region60: #{tpu_custom_call.1} parent=51 // pred_fallthru
          _
      $region52: #{tpu_custom_call.1} parent=5 // pred_fallthru
        _
      %p716 = scmp.le.s32.totalorder 2, %s18
      // Predicated region
      $region61: #{tpu_custom_call.1} parent=5 // pred_check
        %p717 = pneg %p716
      $region62: #{tpu_custom_call.1} parent=5 // pred_check_branch
        %719 = sbr.rel (%p717) target = $region64
      $region63: #{tpu_custom_call.1} parent=5 // pred_region
        %s720 = ssub.s32 %s18, 2
        // Predicated region
        $region65: #{tpu_custom_call.1} parent=63 // pred_check
          %p721 = pneg %p220
        $region66: #{tpu_custom_call.1} parent=63 // pred_check_branch
          %723 = sbr.rel (%p721) target = $region68
        $region67: #{tpu_custom_call.1} parent=63 // pred_region
          %s724 = sand.u32 %s205, 1
          %s725 = scalar_lea.sflag [#allocation3], %s724
          %s726 = sand.u32 %s205, 1
          %s727 = smul.addr %s726, 8
          %s728 = scalar_lea.vmem [#allocation5], %s727
          %729 = dma.done %s725, 128
        $region68: #{tpu_custom_call.1} parent=63 // pred_fallthru
          _
      $region64: #{tpu_custom_call.1} parent=5 // pred_fallthru
        _
    $region6: #{tpu_custom_call.1} parent=1 // loop_footer
      %s22 = sadd.s32 1, %s18
    $region7: #{tpu_custom_call.1} parent=1 // loop_footer_branch
      %17 = sbr.rel target = $region3
    $region8: #{tpu_custom_call.1} parent=1 // loop_exit
      _
    %730 = vsyncpa [#allocation3], 1
    %s731 = scalar_lea.sflag [#allocation3], 1
    %732 = vsyncpa %s731, 1
    %733 = vsyncpa [#allocation4], 1
    %s734 = scalar_lea.sflag [#allocation4], 1
    %735 = vsyncpa %s734, 1

</llo_original>
